<compile_context>
chip_gen: v7x
topology: tpu7x:2x2x1
jax: 0.10.0
libtpu: 0.0.40
codegen_flags: <defaults>
</compile_context>

<pallas_src>
import jax
import jax.numpy as jnp
from jax.experimental import pallas as pl
from jax.experimental.pallas import tpu as pltpu

IN_F = 100     # fc1 input features (native x last dim, not padded)
HID_F = 50     # fc1 output / fc2 input features
HID_PAD = 128  # padded hidden width (weights only; padding is exact-zero)
OUT_F = 10     # fc2 output features (native output last dim, not padded)
MAX_TILE_B = 1024  # upper bound on batch-tile rows


def _round_up(x, m):
    return ((x + m - 1) // m) * m


def mlp_kernel(x_ref, w1_ref, b1_ref, w2_ref, b2_ref, o_ref):
    # fc1 + ReLU (MXU matmul, f32 accumulation). Padded hidden columns of W1
    # are zero, so h's padded lanes are relu(0 + 0) = 0.
    h = jnp.dot(x_ref[...], w1_ref[...], preferred_element_type=jnp.float32)
    h = jnp.maximum(h + b1_ref[...], 0.0)          # (tile_b,128)+(1,128) bcast
    # fc2: padded hidden rows of W2 are zero, so the result is exact.
    out = jnp.dot(h, w2_ref[...], preferred_element_type=jnp.float32)
    o_ref[...] = out + b2_ref[...]                 # (tile_b,10) lane-masked vst


@jax.jit
def net_forward(x, w1p, b1p, w2p, b2p):
    """x: (B, 100) f32. w1p/b1p/w2p/b2p: padded params from prepare_params.

    Returns (B, 10) f32, equal to relu(x @ w1 + b1) @ w2 + b2.
    """
    B = x.shape[0]

    # Round the batch only up to a multiple of 8 (sublane alignment); padded
    # rows are zero and are sliced off at the end. For B % 8 == 0 (common
    # case) this is a no-op: no pad, no slice, no extra HBM pass.
    b_pad = _round_up(B, 8)
    if b_pad != B:
        x = jnp.zeros((b_pad, IN_F), x.dtype).at[:B].set(x)

    # Large tiles amortize per-grid-step overhead; cap at ceil(b_pad/2) so the
    # grid has >=2 steps whenever possible (both v7x TensorCores get work).
    tile_b = max(8, min(MAX_TILE_B, _round_up(pl.cdiv(b_pad, 2), 8)))
    grid = (pl.cdiv(b_pad, tile_b),)   # ragged last block handled by Pallas

    out = pl.pallas_call(
        mlp_kernel,
        out_shape=jax.ShapeDtypeStruct((b_pad, OUT_F), jnp.float32),
        grid=grid,
        in_specs=[
            # x tile, streamed at native 100-lane width (full last dim).
            pl.BlockSpec((tile_b, IN_F), lambda i: (i, 0)),
            # Weights/biases: constant index_map -> fetched once, VMEM-resident.
            pl.BlockSpec((IN_F, HID_PAD), lambda i: (0, 0)),   # W1 (100,128)
            pl.BlockSpec((1, HID_PAD), lambda i: (0, 0)),      # b1 (1,128)
            pl.BlockSpec((HID_PAD, OUT_F), lambda i: (0, 0)),  # W2 (128,10)
            pl.BlockSpec((1, OUT_F), lambda i: (0, 0)),        # b2 (1,10)
        ],
        # Native-width output block: (tile_b, 10), no slab, no wrapper slice.
        out_specs=pl.BlockSpec((tile_b, OUT_F), lambda i: (i, 0)),
        compiler_params=pltpu.CompilerParams(
            dimension_semantics=("parallel",),
        ),
    )(x, w1p, b1p, w2p, b2p)

    return out if b_pad == B else out[:B]


def prepare_params(w1, b1, w2, b2):
    """Pad params once, OUTSIDE the hot forward path (per perf review).

    w1: (100, 50), b1: (50,), w2: (50, 10), b2: (10,)  ->
    w1p: (100, 128), b1p: (1, 128), w2p: (128, 10), b2p: (1, 10)
    Zero padding keeps both matmuls numerically exact.
    """
    w1p = jnp.zeros((IN_F, HID_PAD), jnp.float32).at[:, :HID_F].set(w1)
    b1p = jnp.zeros((1, HID_PAD), jnp.float32).at[0, :HID_F].set(b1.reshape(-1))
    w2p = jnp.zeros((HID_PAD, OUT_F), jnp.float32).at[:HID_F, :].set(w2)
    b2p = b2.reshape(1, OUT_F).astype(jnp.float32)
    return w1p, b1p, w2p, b2p


def init_params(key):
    """Deterministic init mimicking nn.Linear default (U[-1/sqrt(fan_in), +])."""
    k1, k2, k3, k4 = jax.random.split(key, 4)
    bound1 = 1.0 / jnp.sqrt(float(IN_F))
    bound2 = 1.0 / jnp.sqrt(float(HID_F))
    # Stored as (in, out) so the kernel does x @ W (== PyTorch x @ W.T).
    w1 = jax.random.uniform(k1, (IN_F, HID_F), jnp.float32, -bound1, bound1)
    b1 = jax.random.uniform(k2, (HID_F,), jnp.float32, -bound1, bound1)
    w2 = jax.random.uniform(k3, (HID_F, OUT_F), jnp.float32, -bound2, bound2)
    b2 = jax.random.uniform(k4, (OUT_F,), jnp.float32, -bound2, bound2)
    return w1, b1, w2, b2


if __name__ == "__main__":
    key = jax.random.PRNGKey(0)
    kx, kp = jax.random.split(key)
    w1, b1, w2, b2 = init_params(kp)
    # Pad weights once, outside the jitted forward (hot path stays clean).
    params = prepare_params(w1, b1, w2, b2)

    # Primary check: small aligned batch.
    batch = 8
    x = jax.random.normal(kx, (batch, IN_F), jnp.float32)
    out = net_forward(x, *params)
    jax.block_until_ready(out)
    ref = jnp.maximum(x @ w1 + b1[None, :], 0.0) @ w2 + b2[None, :]
    assert out.shape == (batch, OUT_F)
    assert jnp.allclose(out, ref, atol=1e-5, rtol=1e-5)

    # Secondary check: non-multiple-of-8 batch exercising the multi-step
    # (ragged last block) grid path and the batch pad/slice.
    batch2 = 50
    x2 = jax.random.normal(kx, (batch2, IN_F), jnp.float32)
    out2 = net_forward(x2, *params)
    jax.block_until_ready(out2)
    ref2 = jnp.maximum(x2 @ w1 + b1[None, :], 0.0) @ w2 + b2[None, :]
    assert out2.shape == (batch2, OUT_F)
    assert jnp.allclose(out2, ref2, atol=1e-5, rtol=1e-5)

    print("KERNEL_OK")
</pallas_src>

<mosaic_0001>
module attributes {stable_mosaic.version = 11 : i64} {
  func.func @mlp_kernel(%arg0: i32, %arg1: memref<8x100xf32, #tpu.memory_space<vmem>>, %arg2: memref<100x128xf32, #tpu.memory_space<vmem>>, %arg3: memref<1x128xf32, #tpu.memory_space<vmem>>, %arg4: memref<128x10xf32, #tpu.memory_space<vmem>>, %arg5: memref<1x10xf32, #tpu.memory_space<vmem>>, %arg6: memref<8x10xf32, #tpu.memory_space<vmem>>) attributes {dimension_semantics = [#tpu.dimension_semantics<parallel>], iteration_bounds = array<i64: 1>, scalar_prefetch = 0 : i64, scratch_operands = 0 : i64, tpu.core_type = #tpu.core_type<tc>, window_params = [{transform_indices = @transform_0, window_bounds = array<i64: 8, 100>}, {pipeline_mode = #tpu.pipeline_mode<synchronous>, transform_indices = @transform_1, window_bounds = array<i64: 100, 128>}, {pipeline_mode = #tpu.pipeline_mode<synchronous>, transform_indices = @transform_2, window_bounds = array<i64: 1, 128>}, {pipeline_mode = #tpu.pipeline_mode<synchronous>, transform_indices = @transform_3, window_bounds = array<i64: 128, 10>}, {pipeline_mode = #tpu.pipeline_mode<synchronous>, transform_indices = @transform_4, window_bounds = array<i64: 1, 10>}, {transform_indices = @transform_5, window_bounds = array<i64: 8, 10>}]} {
    %c0 = arith.constant 0 : index
    %c0_0 = arith.constant 0 : index
    %0 = vector.load %arg1[%c0, %c0_0] : memref<8x100xf32, #tpu.memory_space<vmem>>, vector<8x100xf32>
    %c0_1 = arith.constant 0 : index
    %c0_2 = arith.constant 0 : index
    %1 = vector.load %arg2[%c0_1, %c0_2] : memref<100x128xf32, #tpu.memory_space<vmem>>, vector<100x128xf32>
    %cst = arith.constant dense<0.000000e+00> : vector<8x128xf32>
    %2 = tpu.matmul %0, %1, %cst {dimension_numbers = #tpu.dot_dimension_numbers<[1], [0], [0], [1], [0, 0, 1, 1], [], []>} : vector<8x100xf32>, vector<100x128xf32>, vector<8x128xf32> -> vector<8x128xf32>
    %c0_3 = arith.constant 0 : index
    %c0_4 = arith.constant 0 : index
    %3 = vector.load %arg3[%c0_3, %c0_4] : memref<1x128xf32, #tpu.memory_space<vmem>>, vector<1x128xf32>
    %4 = vector.broadcast %3 : vector<1x128xf32> to vector<8x128xf32>
    %5 = arith.addf %2, %4 : vector<8x128xf32>
    %cst_5 = arith.constant 0.000000e+00 : f32
    %6 = vector.broadcast %cst_5 : f32 to vector<8x128xf32>
    %7 = arith.maximumf %5, %6 : vector<8x128xf32>
    %c0_6 = arith.constant 0 : index
    %c0_7 = arith.constant 0 : index
    %8 = vector.load %arg4[%c0_6, %c0_7] : memref<128x10xf32, #tpu.memory_space<vmem>>, vector<128x10xf32>
    %cst_8 = arith.constant dense<0.000000e+00> : vector<8x10xf32>
    %9 = tpu.matmul %7, %8, %cst_8 {dimension_numbers = #tpu.dot_dimension_numbers<[1], [0], [0], [1], [0, 0, 1, 1], [], []>} : vector<8x128xf32>, vector<128x10xf32>, vector<8x10xf32> -> vector<8x10xf32>
    %c0_9 = arith.constant 0 : index
    %c0_10 = arith.constant 0 : index
    %10 = vector.load %arg5[%c0_9, %c0_10] : memref<1x10xf32, #tpu.memory_space<vmem>>, vector<1x10xf32>
    %11 = vector.broadcast %10 : vector<1x10xf32> to vector<8x10xf32>
    %12 = arith.addf %9, %11 : vector<8x10xf32>
    %c0_11 = arith.constant 0 : index
    %c0_12 = arith.constant 0 : index
    %13 = vector.load %arg6[%c0_11, %c0_12] : memref<8x10xf32, #tpu.memory_space<vmem>>, vector<8x10xf32>
    tpu.vector_store %arg6[%c0_11, %c0_12], %12 {strides = array<i32>} : memref<8x10xf32, #tpu.memory_space<vmem>>, vector<8x10xf32>,
    return
  }
  func.func @transform_0(%arg0: i32) -> (i32, i32) {
    %c0_i32 = arith.constant 0 : i32
    %c0_i32_0 = arith.constant 0 : i32
    return %arg0, %c0_i32 : i32, i32
  }
  func.func @transform_1(%arg0: i32) -> (i32, i32) {
    %c0_i32 = arith.constant 0 : i32
    %c0_i32_0 = arith.constant 0 : i32
    %c0_i32_1 = arith.constant 0 : i32
    return %c0_i32, %c0_i32_0 : i32, i32
  }
  func.func @transform_2(%arg0: i32) -> (i32, i32) {
    %c0_i32 = arith.constant 0 : i32
    %c0_i32_0 = arith.constant 0 : i32
    %c0_i32_1 = arith.constant 0 : i32
    return %c0_i32, %c0_i32_0 : i32, i32
  }
  func.func @transform_3(%arg0: i32) -> (i32, i32) {
    %c0_i32 = arith.constant 0 : i32
    %c0_i32_0 = arith.constant 0 : i32
    %c0_i32_1 = arith.constant 0 : i32
    return %c0_i32, %c0_i32_0 : i32, i32
  }
  func.func @transform_4(%arg0: i32) -> (i32, i32) {
    %c0_i32 = arith.constant 0 : i32
    %c0_i32_0 = arith.constant 0 : i32
    %c0_i32_1 = arith.constant 0 : i32
    return %c0_i32, %c0_i32_0 : i32, i32
  }
  func.func @transform_5(%arg0: i32) -> (i32, i32) {
    %c0_i32 = arith.constant 0 : i32
    %c0_i32_0 = arith.constant 0 : i32
    return %arg0, %c0_i32 : i32, i32
  }
}

</mosaic_0001>

<llo_original>
// kernel: net_forward.1
$region0: #{net_forward.1}
  #allocation0 [shape = 'u32[]', space=smem, size = 0x4, offset = 0x4, fixed_abs, tag = 'smem constant byte address 0x4 - core index']
  #allocation1 [shape = 'u32[144,128]{1,0:T(1,128)}', space=vmem, size = 0x12000, scoped, tag = 'internal scratch']
  %s0 = inlined_call_operand.vmem [shape: f32[8,100], index: 0, kind: input, shape index: {}]
  %s1 = inlined_call_operand.vmem [shape: f32[100,128], index: 1, kind: input, shape index: {}]
  %s2 = inlined_call_operand.vmem [shape: f32[1,128], index: 2, kind: input, shape index: {}]
  %s3 = inlined_call_operand.vmem [shape: f32[128,10], index: 3, kind: input, shape index: {}]
  %s4 = inlined_call_operand.vmem [shape: f32[1,10], index: 4, kind: input, shape index: {}]
  %s5 = inlined_call_operand.hbm [shape: f32[8,10], index: 5, kind: output, shape index: {}]
  %s6 = sld [smem:[#allocation0]]
  $region30: #{net_forward.1} parent=0
    _
  %s8 = ssub.s32 1, %s6
  %s9 = scalar_select 0, %s8, %s6
  $region1: #{net_forward.1} parent=0
    #allocation2 [shape = 'u8[4096]{0}', space=vmem, size = 0x1000, scoped, tag = 'output window, operand 0, single buffered']
    #allocation3 [shape = 's32[1]{0}', space=sflag, size = 0x4, scoped, tag = 'scoped memory for net_forward.1']
    %10 = vsyncpa [#allocation3], 0
    // Predicated region
    $region2: #{net_forward.1} parent=1 // pred_check
      _
    $region3: #{net_forward.1} parent=1 // pred_check_branch
      %12 = sbr.rel (0) target = $region5
    $region4: #{net_forward.1} parent=1 // pred_region
      _
    $region5: #{net_forward.1} parent=1 // pred_fallthru
      _
    // Predicated region
    $region6: #{net_forward.1} parent=1 // pred_check
      _
    $region7: #{net_forward.1} parent=1 // pred_check_branch
      %14 = sbr.rel (0) target = $region9
    $region8: #{net_forward.1} parent=1 // pred_region
      _
    $region9: #{net_forward.1} parent=1 // pred_fallthru
      _
    // Predicated region
    $region10: #{net_forward.1} parent=1 // pred_check
      _
    $region11: #{net_forward.1} parent=1 // pred_check_branch
      %16 = sbr.rel (0) target = $region13
    $region12: #{net_forward.1} parent=1 // pred_region
      _
    $region13: #{net_forward.1} parent=1 // pred_fallthru
      _
    // Predicated region
    $region14: #{net_forward.1} parent=1 // pred_check
      _
    $region15: #{net_forward.1} parent=1 // pred_check_branch
      %18 = sbr.rel (0) target = $region17
    $region16: #{net_forward.1} parent=1 // pred_region
      _
    $region17: #{net_forward.1} parent=1 // pred_fallthru
      _
    // Predicated region
    $region18: #{net_forward.1} parent=1 // pred_check
      _
    $region19: #{net_forward.1} parent=1 // pred_check_branch
      %20 = sbr.rel (0) target = $region21
    $region20: #{net_forward.1} parent=1 // pred_region
      _
    $region21: #{net_forward.1} parent=1 // pred_fallthru
      _
    %v21 = vld [vmem:[%s0] sm:$0xff]
    %v22 = vld [vmem:[%s1] sm:$0xff]
    %v23 = vld [vmem:[%s1 + $0x8] sm:$0xff]
    %v24 = vld [vmem:[%s1 + $0x10] sm:$0xff]
    %v25 = vld [vmem:[%s1 + $0x18] sm:$0xff]
    %v26 = vld [vmem:[%s1 + $0x20] sm:$0xff]
    %v27 = vld [vmem:[%s1 + $0x28] sm:$0xff]
    %v28 = vld [vmem:[%s1 + $0x30] sm:$0xff]
    %v29 = vld [vmem:[%s1 + $0x38] sm:$0xff]
    %v30 = vld [vmem:[%s1 + $0x40] sm:$0xff]
    %v31 = vld [vmem:[%s1 + $0x48] sm:$0xff]
    %v32 = vld [vmem:[%s1 + $0x50] sm:$0xff]
    %v33 = vld [vmem:[%s1 + $0x58] sm:$0xff]
    %v34 = vld [vmem:[%s1 + $0x60] sm:$0xf]
    %v35 = vld [vmem:[%s2] sm:$0x1]
    %v37 = vlaneseq
    %v38 = vshrl.u32 %v37, 7
    %v39 = vsub.s32 0, %v38
    %v40 = vrot.slane %v35, %v39
    %vm42 = vcmask 818176
    %v44 = vsel %vm42, %v21, 0
    %vm46 = vcmask 1043456
    %v48 = vsel %vm46, %v34, 0
    %50 = vmatprep.subr.mxu0 0.0
    %51 = vmatpush1.msra.mxu0 %v22
    %52 = vmatprep.subr.mxu0 0.0
    %53 = vmatpush1.msra.mxu0 %v23
    %54 = vmatprep.subr.mxu0 0.0
    %55 = vmatpush1.msra.mxu0 %v24
    %56 = vmatprep.subr.mxu0 0.0
    %57 = vmatpush1.msra.mxu0 %v25
    %58 = vmatprep.subr.mxu0 0.0
    %59 = vmatpush1.msra.mxu0 %v26
    %60 = vmatprep.subr.mxu0 0.0
    %61 = vmatpush1.msra.mxu0 %v27
    %62 = vmatprep.subr.mxu0 0.0
    %63 = vmatpush1.msra.mxu0 %v28
    %64 = vmatprep.subr.mxu0 0.0
    %65 = vmatpush1.msra.mxu0 %v29
    %66 = vmatprep.subr.mxu0 0.0
    %67 = vmatpush1.msra.mxu0 %v30
    %68 = vmatprep.subr.mxu0 0.0
    %69 = vmatpush1.msra.mxu0 %v31
    %70 = vmatprep.subr.mxu0 0.0
    %71 = vmatpush1.msra.mxu0 %v32
    %72 = vmatprep.subr.mxu0 0.0
    %73 = vmatpush1.msra.mxu0 %v33
    %74 = vmatprep.subr.mxu0 0.0
    %75 = vmatpush1.msra.mxu0 %v48
    %76 = vmatprep.subr.mxu0 0.0
    %77 = vmatpush1.msra.mxu0 0.0
    %78 = vmatprep.subr.mxu0 0.0
    %79 = vmatpush1.msra.mxu0 0.0
    %80 = vmatprep.subr.mxu0 0.0
    %81 = vmatpush1.msra.mxu0 0.0
    %82 = vmatprep.subr.mxu0 0.0
    %83 = vmatpush1.msra.mxu0 0.0
    %84 = vmatprep.subr.mxu0 0.0
    %85 = vmatpush1.msra.mxu0 0.0
    %86 = vmatprep.subr.mxu0 0.0
    %87 = vmatpush1.msra.mxu0 0.0
    %88 = vmatprep.subr.mxu0 0.0
    %89 = vmatpush1.msra.mxu0 0.0
    %90 = vmatprep.subr.mxu0 0.0
    %91 = vmatpush1.msra.mxu0 0.0
    %92 = vmatprep.subr.mxu0 0.0
    %93 = vmatpush1.msra.mxu0 0.0
    %94 = vmatprep.subr.mxu0 0.0
    %95 = vmatpush1.msra.mxu0 0.0
    %96 = vmatprep.subr.mxu0 0.0
    %97 = vmatpush1.msra.mxu0 0.0
    %98 = vmatprep.subr.mxu0 0.0
    %99 = vmatpush1.msra.mxu0 0.0
    %100 = vmatprep.subr.mxu0 0.0
    %101 = vmatpush1.msra.mxu0 0.0
    %102 = vmatprep.subr.mxu0 0.0
    %103 = vmatpush1.msra.mxu0 0.0
    %104 = vmatprep.subr.mxu0 0.0
    %105 = vmatpush1.msra.mxu0 0.0
    %106 = vmatprep.subr.mxu0 0.0
    %107 = vmatpush1.msra.mxu0 0.0
    %108 = vmatprep.subr.mxu0 0.0
    %109 = vmatpush1.msra.mxu0 0.0
    %110 = vmatprep.subr.mxu0 0.0
    %111 = vmatpush1.msra.mxu0 0.0
    %112 = vmatprep.subr.mxu0 0.0
    %113 = vmatpush1.msra.mxu0 0.0
    %114 = vmatprep.mubr.f32.mxu0 0.0
    %115 = vmatmul.mubr.f32.gmra.mrb[0].mxu0 %v44
    %v116 = vpop.f32.mrb[0].mxu0
    %v117 = vadd.f32 %v40, %v116
    %v118 = vpop.f32.mrb[0].mxu0
    %119 = vdwg.mxu0
    %v120 = vmax.f32 %v117, 0.0
    %v121 = vld [vmem:[%s3] sm:$0xff]
    %v122 = vld [vmem:[%s3 + $0x8] sm:$0xff]
    %v123 = vld [vmem:[%s3 + $0x10] sm:$0xff]
    %v124 = vld [vmem:[%s3 + $0x18] sm:$0xff]
    %v125 = vld [vmem:[%s3 + $0x20] sm:$0xff]
    %v126 = vld [vmem:[%s3 + $0x28] sm:$0xff]
    %v127 = vld [vmem:[%s3 + $0x30] sm:$0xff]
    %v128 = vld [vmem:[%s3 + $0x38] sm:$0xff]
    %v129 = vld [vmem:[%s3 + $0x40] sm:$0xff]
    %v130 = vld [vmem:[%s3 + $0x48] sm:$0xff]
    %v131 = vld [vmem:[%s3 + $0x50] sm:$0xff]
    %v132 = vld [vmem:[%s3 + $0x58] sm:$0xff]
    %v133 = vld [vmem:[%s3 + $0x60] sm:$0xff]
    %v134 = vld [vmem:[%s3 + $0x68] sm:$0xff]
    %v135 = vld [vmem:[%s3 + $0x70] sm:$0xff]
    %v136 = vld [vmem:[%s3 + $0x78] sm:$0xff]
    %v137 = vld [vmem:[%s4] sm:$0x1]
    %v139 = vlaneseq
    %v140 = vshrl.u32 %v139, 7
    %v141 = vsub.s32 0, %v140
    %v142 = vrot.slane %v137, %v141
    %144 = vmatprep.subr.mxu0 0.0
    %145 = vmatpush1.msra.mxu0 %v121
    %146 = vmatprep.subr.mxu0 0.0
    %147 = vmatpush1.msra.mxu0 %v122
    %148 = vmatprep.subr.mxu0 0.0
    %149 = vmatpush1.msra.mxu0 %v123
    %150 = vmatprep.subr.mxu0 0.0
    %151 = vmatpush1.msra.mxu0 %v124
    %152 = vmatprep.subr.mxu0 0.0
    %153 = vmatpush1.msra.mxu0 %v125
    %154 = vmatprep.subr.mxu0 0.0
    %155 = vmatpush1.msra.mxu0 %v126
    %156 = vmatprep.subr.mxu0 0.0
    %157 = vmatpush1.msra.mxu0 %v127
    %158 = vmatprep.subr.mxu0 0.0
    %159 = vmatpush1.msra.mxu0 %v128
    %160 = vmatprep.subr.mxu0 0.0
    %161 = vmatpush1.msra.mxu0 %v129
    %162 = vmatprep.subr.mxu0 0.0
    %163 = vmatpush1.msra.mxu0 %v130
    %164 = vmatprep.subr.mxu0 0.0
    %165 = vmatpush1.msra.mxu0 %v131
    %166 = vmatprep.subr.mxu0 0.0
    %167 = vmatpush1.msra.mxu0 %v132
    %168 = vmatprep.subr.mxu0 0.0
    %169 = vmatpush1.msra.mxu0 %v133
    %170 = vmatprep.subr.mxu0 0.0
    %171 = vmatpush1.msra.mxu0 %v134
    %172 = vmatprep.subr.mxu0 0.0
    %173 = vmatpush1.msra.mxu0 %v135
    %174 = vmatprep.subr.mxu0 0.0
    %175 = vmatpush1.msra.mxu0 %v136
    %176 = vmatprep.subr.mxu0 0.0
    %177 = vmatpush1.msra.mxu0 0.0
    %178 = vmatprep.subr.mxu0 0.0
    %179 = vmatpush1.msra.mxu0 0.0
    %180 = vmatprep.subr.mxu0 0.0
    %181 = vmatpush1.msra.mxu0 0.0
    %182 = vmatprep.subr.mxu0 0.0
    %183 = vmatpush1.msra.mxu0 0.0
    %184 = vmatprep.subr.mxu0 0.0
    %185 = vmatpush1.msra.mxu0 0.0
    %186 = vmatprep.subr.mxu0 0.0
    %187 = vmatpush1.msra.mxu0 0.0
    %188 = vmatprep.subr.mxu0 0.0
    %189 = vmatpush1.msra.mxu0 0.0
    %190 = vmatprep.subr.mxu0 0.0
    %191 = vmatpush1.msra.mxu0 0.0
    %192 = vmatprep.subr.mxu0 0.0
    %193 = vmatpush1.msra.mxu0 0.0
    %194 = vmatprep.subr.mxu0 0.0
    %195 = vmatpush1.msra.mxu0 0.0
    %196 = vmatprep.subr.mxu0 0.0
    %197 = vmatpush1.msra.mxu0 0.0
    %198 = vmatprep.subr.mxu0 0.0
    %199 = vmatpush1.msra.mxu0 0.0
    %200 = vmatprep.subr.mxu0 0.0
    %201 = vmatpush1.msra.mxu0 0.0
    %202 = vmatprep.subr.mxu0 0.0
    %203 = vmatpush1.msra.mxu0 0.0
    %204 = vmatprep.subr.mxu0 0.0
    %205 = vmatpush1.msra.mxu0 0.0
    %206 = vmatprep.subr.mxu0 0.0
    %207 = vmatpush1.msra.mxu0 0.0
    %208 = vmatprep.mubr.f32.mxu0 0.0
    %209 = vmatmul.mubr.f32.gmra.mrb[0].mxu0 %v120
    %v210 = vpop.f32.mrb[0].mxu0
    %v211 = vadd.f32 %v142, %v210
    %v212 = vpop.f32.mrb[0].mxu0
    %213 = vdwg.mxu0
    %vm214 = vcmask 80896
    %215 = vst.msk [vmem:[#allocation2] sm:$0xff] %vm214, %v211
    // Predicated region
    $region22: #{net_forward.1} parent=1 // pred_check
      _
    $region23: #{net_forward.1} parent=1 // pred_check_branch
      %217 = sbr.rel (0) target = $region25
    $region24: #{net_forward.1} parent=1 // pred_region
      %s219 = ssub.s32 128, 128
      %220 = vsyncadd [#allocation3], %s219
      %s222 = sshll.u32 [#allocation2], 4
      %s223 = int_to_ptr.vmem [resolvable:$true] %s222
      %225 = dma.vmem_to_hbm [thread:$0]  %s223, 128, %s5, [#allocation3]
    $region25: #{net_forward.1} parent=1 // pred_fallthru
      _
    // Predicated region
    $region26: #{net_forward.1} parent=1 // pred_check
      _
    $region27: #{net_forward.1} parent=1 // pred_check_branch
      %227 = sbr.rel (0) target = $region29
    $region28: #{net_forward.1} parent=1 // pred_region
      %228 = dma.done [#allocation3], 128
    $region29: #{net_forward.1} parent=1 // pred_fallthru
      _
    %229 = vsyncpa [#allocation3], 1

</llo_original>
